<compile_context>
chip_gen: v7x
topology: tpu7x:2x2x1
jax: 0.10.0
libtpu: 0.0.40
codegen_flags: <defaults>
</compile_context>

<pallas_src>
import math
from functools import partial

import jax
import jax.numpy as jnp
from jax import lax
from jax.experimental import pallas as pl
from jax.experimental.pallas import tpu as pltpu


# ----------------------------- Pallas LayerNorm -----------------------------

def _ln_kernel(x_ref, g_ref, b_ref, o_ref, *, eps):
    # x_ref: (tm, dim); g_ref/b_ref: (1, dim) f32; o_ref: (tm, dim)
    x = x_ref[...].astype(jnp.float32)
    mean = jnp.mean(x, axis=-1, keepdims=True)
    xc = x - mean
    var = jnp.mean(xc * xc, axis=-1, keepdims=True)        # biased, torch LN
    inv = lax.rsqrt(var + eps)                              # EUP slot
    if o_ref.dtype == jnp.bfloat16:
        # bf16 epilogue (v7x: VALU-limited at ~3.2 TB/s HBM); stats stay f32.
        xn = (xc * inv).astype(jnp.bfloat16)
        o_ref[...] = (xn * g_ref[...].astype(jnp.bfloat16)
                      + b_ref[...].astype(jnp.bfloat16))
    else:
        y = xc * inv * g_ref[...] + b_ref[...]
        o_ref[...] = y.astype(o_ref.dtype)


def _round_up(x, m):
    return (x + m - 1) // m * m


def _layer_norm_xla(x, gamma, beta, eps, out_dtype):
    # Fallback for lane-sparse dims / tiny row counts (Pallas would run masked
    # partial stores at <= dim/128 lane utilization).
    xf = x.astype(jnp.float32)
    mean = xf.mean(-1, keepdims=True)
    xc = xf - mean
    var = (xc * xc).mean(-1, keepdims=True)
    y = xc * lax.rsqrt(var + eps) * gamma.astype(jnp.float32) + beta.astype(jnp.float32)
    return y.astype(out_dtype)


@partial(jax.jit, static_argnames=("eps", "out_dtype"))
def _layer_norm_impl(x, gamma, beta, *, eps, out_dtype):
    orig_shape = x.shape
    dim = orig_shape[-1]
    M = math.prod(orig_shape[:-1]) if len(orig_shape) > 1 else 1

    # Lane-sparse feature dim or tiny row count -> fused XLA LN is faster/safer.
    if dim % 128 != 0 or M < 8:
        return _layer_norm_xla(x, gamma, beta, eps, out_dtype).reshape(orig_shape)

    x2 = x.reshape(M, dim)
    g2 = gamma.reshape(1, dim).astype(jnp.float32)
    b2 = beta.reshape(1, dim).astype(jnp.float32)

    in_bytes = jnp.dtype(x.dtype).itemsize
    out_bytes = jnp.dtype(out_dtype).itemsize

    # --- row-tile selection from an explicit VMEM budget -------------------
    # Per-row footprint: 2x double-buffered input tile + 2x output tile
    # + ~2 f32 working copies inside the kernel.
    row_bytes = dim * (2 * in_bytes + 2 * out_bytes + 8)
    budget = 24 << 20                      # safe on v5e/v6e/v7x with raised limit
    tm = max(8, min(1024, (budget // row_bytes) // 8 * 8))
    tm = min(tm, _round_up(M, 8))
    if pl.cdiv(M, tm) < 2 and M >= 16:
        # keep >= 2 grid steps so "parallel" can shard rows across TCs (v7x)
        tm = _round_up(pl.cdiv(M, 2), 8)
    grid = pl.cdiv(M, tm)

    vmem_need = tm * dim * (2 * in_bytes + 2 * out_bytes + 8) + 2 * dim * 4
    vmem_limit = max(16 << 20, min(48 << 20, int(vmem_need) + (4 << 20)))

    cost = pl.CostEstimate(
        flops=8 * M * dim,
        transcendentals=M,
        bytes_accessed=M * dim * (in_bytes + out_bytes) + 2 * dim * 4,
    )

    out = pl.pallas_call(
        partial(_ln_kernel, eps=eps),
        out_shape=jax.ShapeDtypeStruct((M, dim), out_dtype),
        grid_spec=pltpu.PrefetchScalarGridSpec(
            num_scalar_prefetch=0,
            grid=(grid,),
            in_specs=[
                pl.BlockSpec((tm, dim), lambda i: (i, 0)),
                pl.BlockSpec((1, dim), lambda i: (0, 0)),   # gamma, resident
                pl.BlockSpec((1, dim), lambda i: (0, 0)),   # beta, resident
            ],
            out_specs=pl.BlockSpec((tm, dim), lambda i: (i, 0)),
        ),
        compiler_params=pltpu.CompilerParams(
            dimension_semantics=("parallel",),
            vmem_limit_bytes=vmem_limit,
        ),
        cost_estimate=cost,
    )(x2, g2, b2)

    return out.reshape(orig_shape[:-1] + (dim,))


def layer_norm(x, gamma, beta, *, eps=1e-5, out_dtype=None):
    """LayerNorm over the last axis (torch semantics). `out_dtype` lets the
    caller receive the normalized tensor already in the dtype `fn` consumes."""
    od = jnp.dtype(x.dtype) if out_dtype is None else jnp.dtype(out_dtype)
    return _layer_norm_impl(x, gamma, beta, eps=float(eps), out_dtype=od)


# --------------------------------- PreNorm ----------------------------------

class PreNorm:
    """JAX/Pallas equivalent of the PyTorch PreNorm module."""

    def __init__(self, dim, fn, context_dim=None, dtype=jnp.float32,
                 fn_input_dtype=None):
        self.fn = fn
        self.fn_input_dtype = fn_input_dtype  # e.g. jnp.bfloat16 to halve writeback
        # nn.LayerNorm defaults: weight = 1, bias = 0, eps = 1e-5
        self.g = jnp.ones((dim,), dtype)
        self.b = jnp.zeros((dim,), dtype)
        if context_dim is not None:
            self.g_ctx = jnp.ones((context_dim,), dtype)
            self.b_ctx = jnp.zeros((context_dim,), dtype)
        else:
            self.g_ctx = None
            self.b_ctx = None

    def __call__(self, x, **kwargs):
        x = layer_norm(x, self.g, self.b, out_dtype=self.fn_input_dtype)
        if self.g_ctx is not None:
            context = kwargs['context']
            normed_context = layer_norm(context, self.g_ctx, self.b_ctx,
                                        out_dtype=self.fn_input_dtype)
            kwargs = dict(kwargs, context=normed_context)
        # TODO(synk): `fn` is an arbitrary sub-module in PyTorch; here it is an
        # arbitrary JAX callable applied after the Pallas LayerNorm(s).
        return self.fn(x, **kwargs)


# ------------------------------- reference ----------------------------------

def _layer_norm_ref(x, g, b, eps=1e-5):
    mean = x.mean(-1, keepdims=True)
    var = ((x - mean) ** 2).mean(-1, keepdims=True)
    return (x - mean) / jnp.sqrt(var + eps) * g + b


if __name__ == "__main__":
    # Small, lane-dense shapes (dim multiples of 128 so the Pallas path runs).
    B, S, dim = 2, 8, 128
    Sc, context_dim = 16, 256

    key = jax.random.PRNGKey(0)
    kx, kc, kg, kb, kgc, kbc, kw, kwc = jax.random.split(key, 8)

    x = jax.random.normal(kx, (B, S, dim), jnp.float32)
    context = jax.random.normal(kc, (B, Sc, context_dim), jnp.float32)

    # A simple deterministic `fn` consuming both x and context.
    w_fn = jax.random.normal(kw, (dim, dim), jnp.float32) * 0.1
    w_ctx = jax.random.normal(kwc, (context_dim, dim), jnp.float32) * 0.1

    def fn(x, context=None):
        y = x @ w_fn
        if context is not None:
            y = y + (context @ w_ctx).mean(axis=1, keepdims=True)
        return y

    module = PreNorm(dim, fn, context_dim=context_dim)
    # Non-trivial affine params so scale/shift is exercised.
    module.g = jax.random.normal(kg, (dim,), jnp.float32) * 0.5 + 1.0
    module.b = jax.random.normal(kb, (dim,), jnp.float32) * 0.1
    module.g_ctx = jax.random.normal(kgc, (context_dim,), jnp.float32) * 0.5 + 1.0
    module.b_ctx = jax.random.normal(kbc, (context_dim,), jnp.float32) * 0.1

    out = module(x, context=context)
    out = jax.block_until_ready(out)

    x_ref = _layer_norm_ref(x, module.g, module.b)
    ctx_ref = _layer_norm_ref(context, module.g_ctx, module.b_ctx)
    ref = fn(x_ref, context=ctx_ref)

    assert out.shape == (B, S, dim)
    assert jnp.allclose(out, ref, atol=1e-4, rtol=1e-4), "mismatch vs reference"

    # bf16 output path (narrowed writeback for `fn`): stats stay f32 in-kernel.
    y_bf16 = jax.block_until_ready(
        layer_norm(x, module.g, module.b, out_dtype=jnp.bfloat16))
    assert y_bf16.dtype == jnp.bfloat16
    assert jnp.allclose(y_bf16.astype(jnp.float32), x_ref, atol=5e-2, rtol=5e-2), \
        "mismatch (bf16 epilogue)"

    # No-context path (norm_context is None).
    module2 = PreNorm(dim, lambda x: x * 2.0)
    out2 = jax.block_until_ready(module2(x))
    ref2 = _layer_norm_ref(x, module2.g, module2.b) * 2.0
    assert jnp.allclose(out2, ref2, atol=1e-4, rtol=1e-4), "mismatch (no context)"

    # Lane-sparse dim exercises the XLA fallback (Pallas would be slower there).
    x_small = jax.random.normal(kx, (B, S, 32), jnp.float32)
    m3 = PreNorm(32, lambda x: x)
    out3 = jax.block_until_ready(m3(x_small))
    assert jnp.allclose(out3, _layer_norm_ref(x_small, m3.g, m3.b),
                        atol=1e-5, rtol=1e-5), "mismatch (fallback)"

    print("KERNEL_OK")
</pallas_src>

<mosaic_0001>
module attributes {stable_mosaic.version = 11 : i64} {
  func.func @_ln_kernel(%arg0: i32, %arg1: memref<8x128xf32, #tpu.memory_space<vmem>>, %arg2: memref<1x128xf32, #tpu.memory_space<vmem>>, %arg3: memref<1x128xf32, #tpu.memory_space<vmem>>, %arg4: memref<8x128xf32, #tpu.memory_space<vmem>>) attributes {dimension_semantics = [#tpu.dimension_semantics<parallel>], iteration_bounds = array<i64: 2>, scalar_prefetch = 0 : i64, scratch_operands = 0 : i64, tpu.core_type = #tpu.core_type<tc>, window_params = [{transform_indices = @transform_0, window_bounds = array<i64: 8, 128>}, {pipeline_mode = #tpu.pipeline_mode<synchronous>, transform_indices = @transform_1, window_bounds = array<i64: 1, 128>}, {pipeline_mode = #tpu.pipeline_mode<synchronous>, transform_indices = @transform_2, window_bounds = array<i64: 1, 128>}, {transform_indices = @transform_3, window_bounds = array<i64: 8, 128>}]} {
    %c0 = arith.constant 0 : index
    %c0_0 = arith.constant 0 : index
    %0 = vector.load %arg1[%c0, %c0_0] : memref<8x128xf32, #tpu.memory_space<vmem>>, vector<8x128xf32>
    %cst = arith.constant dense<0.000000e+00> : vector<8xf32>
    %1 = vector.multi_reduction <add>, %0, %cst [1] : vector<8x128xf32> to vector<8xf32>
    %2 = vector.shape_cast %1 : vector<8xf32> to vector<8x1xf32>
    %cst_1 = arith.constant 1.280000e+02 : f32
    %3 = vector.broadcast %cst_1 : f32 to vector<8x1xf32>
    %4 = arith.divf %2, %3 : vector<8x1xf32>
    %5 = vector.broadcast %4 : vector<8x1xf32> to vector<8x128xf32>
    %6 = arith.subf %0, %5 : vector<8x128xf32>
    %7 = arith.mulf %6, %6 : vector<8x128xf32>
    %cst_2 = arith.constant dense<0.000000e+00> : vector<8xf32>
    %8 = vector.multi_reduction <add>, %7, %cst_2 [1] : vector<8x128xf32> to vector<8xf32>
    %9 = vector.shape_cast %8 : vector<8xf32> to vector<8x1xf32>
    %cst_3 = arith.constant 1.280000e+02 : f32
    %10 = vector.broadcast %cst_3 : f32 to vector<8x1xf32>
    %11 = arith.divf %9, %10 : vector<8x1xf32>
    %cst_4 = arith.constant 9.99999974E-6 : f32
    %12 = vector.broadcast %cst_4 : f32 to vector<8x1xf32>
    %13 = arith.addf %11, %12 : vector<8x1xf32>
    %14 = math.rsqrt %13 : vector<8x1xf32>
    %15 = vector.broadcast %14 : vector<8x1xf32> to vector<8x128xf32>
    %16 = arith.mulf %6, %15 : vector<8x128xf32>
    %c0_5 = arith.constant 0 : index
    %c0_6 = arith.constant 0 : index
    %17 = vector.load %arg2[%c0_5, %c0_6] : memref<1x128xf32, #tpu.memory_space<vmem>>, vector<1x128xf32>
    %18 = vector.broadcast %17 : vector<1x128xf32> to vector<8x128xf32>
    %19 = arith.mulf %16, %18 : vector<8x128xf32>
    %c0_7 = arith.constant 0 : index
    %c0_8 = arith.constant 0 : index
    %20 = vector.load %arg3[%c0_7, %c0_8] : memref<1x128xf32, #tpu.memory_space<vmem>>, vector<1x128xf32>
    %21 = vector.broadcast %20 : vector<1x128xf32> to vector<8x128xf32>
    %22 = arith.addf %19, %21 : vector<8x128xf32>
    %c0_9 = arith.constant 0 : index
    %c0_10 = arith.constant 0 : index
    %23 = vector.load %arg4[%c0_9, %c0_10] : memref<8x128xf32, #tpu.memory_space<vmem>>, vector<8x128xf32>
    tpu.vector_store %arg4[%c0_9, %c0_10], %22 {strides = array<i32>} : memref<8x128xf32, #tpu.memory_space<vmem>>, vector<8x128xf32>,
    return
  }
  func.func @transform_0(%arg0: i32) -> (i32, i32) {
    %c0_i32 = arith.constant 0 : i32
    %c0_i32_0 = arith.constant 0 : i32
    return %arg0, %c0_i32 : i32, i32
  }
  func.func @transform_1(%arg0: i32) -> (i32, i32) {
    %c0_i32 = arith.constant 0 : i32
    %c0_i32_0 = arith.constant 0 : i32
    %c0_i32_1 = arith.constant 0 : i32
    return %c0_i32, %c0_i32_0 : i32, i32
  }
  func.func @transform_2(%arg0: i32) -> (i32, i32) {
    %c0_i32 = arith.constant 0 : i32
    %c0_i32_0 = arith.constant 0 : i32
    %c0_i32_1 = arith.constant 0 : i32
    return %c0_i32, %c0_i32_0 : i32, i32
  }
  func.func @transform_3(%arg0: i32) -> (i32, i32) {
    %c0_i32 = arith.constant 0 : i32
    %c0_i32_0 = arith.constant 0 : i32
    return %arg0, %c0_i32 : i32, i32
  }
}

</mosaic_0001>

<llo_original>
// kernel: _layer_norm_impl.1
$region0: #{_layer_norm_impl.1}
  #allocation0 [shape = 'u32[]', space=smem, size = 0x4, offset = 0x4, fixed_abs, tag = 'smem constant byte address 0x4 - core index']
  #allocation1 [shape = 'u32[144,128]{1,0:T(1,128)}', space=vmem, size = 0x12000, scoped, tag = 'internal scratch']
  %s0 = inlined_call_operand.hbm [shape: f32[16,128], index: 0, kind: input, shape index: {}]
  %s1 = inlined_call_operand.vmem [shape: f32[1,128], index: 1, kind: input, shape index: {}]
  %s2 = inlined_call_operand.vmem [shape: f32[1,128], index: 2, kind: input, shape index: {}]
  %s3 = inlined_call_operand.hbm [shape: f32[16,128], index: 3, kind: output, shape index: {}]
  %s4 = sld [smem:[#allocation0]]
  $region49: #{_layer_norm_impl.1} parent=0
    _
  %s6 = ssub.s32 1, %s4
  %s7 = scalar_select 0, %s6, %s4
  $region1: #{_layer_norm_impl.1} parent=0
    #allocation2 [shape = 'u8[8192]{0}', space=vmem, size = 0x2000, scoped, tag = 'input window, operand 0']
    #allocation3 [shape = 's32[2]{0}', space=sflag, size = 0x8, scoped, tag = 'scoped memory for _layer_norm_impl.1']
    #allocation4 [shape = 's32[2]{0}', space=sflag, size = 0x8, scoped, tag = 'scoped memory for _layer_norm_impl.1']
    #allocation5 [shape = 'u8[8192]{0}', space=vmem, size = 0x2000, scoped, tag = 'output window, operand 0']
    %8 = vsyncpa [#allocation3], 0
    %s9 = scalar_lea.sflag [#allocation3], 1
    %10 = vsyncpa %s9, 0
    %11 = vsyncpa [#allocation4], 0
    %s12 = scalar_lea.sflag [#allocation4], 1
    %13 = vsyncpa %s12, 0
    loop: start=0, step=1, limit=4
    $region2: #{_layer_norm_impl.1} parent=1 // loop_pre_header
      _
    $region3: #{_layer_norm_impl.1} parent=1 // loop_header
      %s15 = sphi 0, %s19
      %p16 = scmp.ge.s32.totalorder %s15, 4
      %s25 = sphi 0, %s27
      %s28 = sphi 0, %s25
      %s29 = sphi 0, %s28
      %s45 = sphi 0, %s29
      %s49 = sphi 0, %s49
      %s51 = sphi 0, %s49
      %s52 = sphi 0, %s51
      %s66 = sphi 0, %s52
      %s70 = sphi 0, %s70
      %s72 = sphi 0, %s70
      %s73 = sphi 0, %s72
      %s87 = sphi 0, %s73
      %s93 = sphi 0, %s95
      %s96 = sphi 0, %s93
      %s97 = sphi 0, %s96
      %s113 = sphi 0, %s97
    $region4: #{_layer_norm_impl.1} parent=1 // loop_header_branch
      %18 = sbr.rel (%p16) target = $region8
    $region5: #{_layer_norm_impl.1} parent=1 // loop_body
      %s20 = ssub.s32 %s15, 1
      %s21 = ssub.s32 %s15, 2
      %s22 = sadd.s32 %s15, 1
      %s23 = ssub.s32 %s15, %s22
      %p24 = scmp.eq.s32.totalorder %s23, 0
      %s26 = sadd.s32 %s25, 1
      %s27 = scalar_select %p24, %s25, %s26
      %p30 = pneg %p24
      %p31 = scmp.eq.s32.totalorder %s15, 1
      %p32 = por %p30, %p31
      %p33 = scmp.ne.s32.totalorder %s25, %s28
      %p34 = scmp.eq.s32.totalorder %s15, 0
      %p35 = por %p33, %p34
      %p36 = scmp.ne.s32.totalorder %s25, %s28
      %p37 = scmp.eq.s32.totalorder %s20, 1
      %p38 = por %p36, %p37
      %p39 = scmp.ne.s32.totalorder %s28, %s29
      %p40 = scmp.eq.s32.totalorder %s20, 0
      %p41 = por %p39, %p40
      %p42 = scmp.ne.s32.totalorder %s28, %s29
      %p43 = scmp.eq.s32.totalorder %s21, 1
      %p44 = por %p42, %p43
      %p46 = scmp.ne.s32.totalorder %s29, %s45
      %p47 = scmp.eq.s32.totalorder %s21, 0
      %p48 = por %p46, %p47
      %s50 = sadd.s32 %s49, 1
      %p53 = scmp.eq.s32.totalorder %s15, 1
      %p54 = scmp.ne.s32.totalorder %s49, %s51
      %p55 = scmp.eq.s32.totalorder %s15, 0
      %p56 = por %p54, %p55
      %p57 = scmp.ne.s32.totalorder %s49, %s51
      %p58 = scmp.eq.s32.totalorder %s20, 1
      %p59 = por %p57, %p58
      %p60 = scmp.ne.s32.totalorder %s51, %s52
      %p61 = scmp.eq.s32.totalorder %s20, 0
      %p62 = por %p60, %p61
      %p63 = scmp.ne.s32.totalorder %s51, %s52
      %p64 = scmp.eq.s32.totalorder %s21, 1
      %p65 = por %p63, %p64
      %p67 = scmp.ne.s32.totalorder %s52, %s66
      %p68 = scmp.eq.s32.totalorder %s21, 0
      %p69 = por %p67, %p68
      %s71 = sadd.s32 %s70, 1
      %p74 = scmp.eq.s32.totalorder %s15, 1
      %p75 = scmp.ne.s32.totalorder %s70, %s72
      %p76 = scmp.eq.s32.totalorder %s15, 0
      %p77 = por %p75, %p76
      %p78 = scmp.ne.s32.totalorder %s70, %s72
      %p79 = scmp.eq.s32.totalorder %s20, 1
      %p80 = por %p78, %p79
      %p81 = scmp.ne.s32.totalorder %s72, %s73
      %p82 = scmp.eq.s32.totalorder %s20, 0
      %p83 = por %p81, %p82
      %p84 = scmp.ne.s32.totalorder %s72, %s73
      %p85 = scmp.eq.s32.totalorder %s21, 1
      %p86 = por %p84, %p85
      %p88 = scmp.ne.s32.totalorder %s73, %s87
      %p89 = scmp.eq.s32.totalorder %s21, 0
      %p90 = por %p88, %p89
      %s91 = ssub.s32 %s15, %s22
      %p92 = scmp.eq.s32.totalorder %s91, 0
      %s94 = sadd.s32 %s93, 1
      %s95 = scalar_select %p92, %s93, %s94
      %p98 = pneg %p92
      %p99 = scmp.eq.s32.totalorder %s15, 1
      %p100 = por %p98, %p99
      %p101 = scmp.ne.s32.totalorder %s93, %s96
      %p102 = scmp.eq.s32.totalorder %s15, 0
      %p103 = por %p101, %p102
      %p104 = scmp.ne.s32.totalorder %s93, %s96
      %p105 = scmp.eq.s32.totalorder %s20, 1
      %p106 = por %p104, %p105
      %p107 = scmp.ne.s32.totalorder %s96, %s97
      %p108 = scmp.eq.s32.totalorder %s20, 0
      %p109 = por %p107, %p108
      %p110 = scmp.ne.s32.totalorder %s96, %s97
      %p111 = scmp.eq.s32.totalorder %s21, 1
      %p112 = por %p110, %p111
      %p114 = scmp.ne.s32.totalorder %s97, %s113
      %p115 = scmp.eq.s32.totalorder %s21, 0
      %p116 = por %p114, %p115
      %p117 = scmp.le.s32.totalorder 1, %s15
      %p118 = scmp.lt.s32.totalorder %s15, 3
      %p119 = pnand %p117, %p118
      %p120 = pneg %p119
      // Predicated region
      $region9: #{_layer_norm_impl.1} parent=5 // pred_check
        _
      $region10: #{_layer_norm_impl.1} parent=5 // pred_check_branch
        %122 = sbr.rel (%p119) target = $region12
      $region11: #{_layer_norm_impl.1} parent=5 // pred_region
        %s123 = ssub.s32 %s15, 1
        // Predicated region
        $region13: #{_layer_norm_impl.1} parent=11 // pred_check
          %p124 = pneg %p62
        $region14: #{_layer_norm_impl.1} parent=11 // pred_check_branch
          %126 = sbr.rel (%p124) target = $region16
        $region15: #{_layer_norm_impl.1} parent=11 // pred_region
          _
        $region16: #{_layer_norm_impl.1} parent=11 // pred_fallthru
          _
        // Predicated region
        $region17: #{_layer_norm_impl.1} parent=11 // pred_check
          %p127 = pneg %p83
        $region18: #{_layer_norm_impl.1} parent=11 // pred_check_branch
          %129 = sbr.rel (%p127) target = $region20
        $region19: #{_layer_norm_impl.1} parent=11 // pred_region
          _
        $region20: #{_layer_norm_impl.1} parent=11 // pred_fallthru
          _
      $region12: #{_layer_norm_impl.1} parent=5 // pred_fallthru
        _
      %p130 = scmp.lt.s32.totalorder %s15, 2
      // Predicated region
      $region21: #{_layer_norm_impl.1} parent=5 // pred_check
        %p131 = pneg %p130
      $region22: #{_layer_norm_impl.1} parent=5 // pred_check_branch
        %133 = sbr.rel (%p131) target = $region24
      $region23: #{_layer_norm_impl.1} parent=5 // pred_region
        // Predicated region
        $region25: #{_layer_norm_impl.1} parent=23 // pred_check
          %p134 = pneg %p35
        $region26: #{_layer_norm_impl.1} parent=23 // pred_check_branch
          %136 = sbr.rel (%p134) target = $region28
        $region27: #{_layer_norm_impl.1} parent=23 // pred_region
          %s137 = sand.u32 %s25, 1
          %s138 = scalar_lea.sflag [#allocation3], %s137
          %s139 = sand.u32 %s25, 1
          %s140 = smul.addr %s139, 8
          %s141 = scalar_lea.vmem [#allocation2], %s140
          %s143 = ssub.s32 128, 128
          %144 = vsyncadd %s138, %s143
          %s145 = smul.addr %s15, 128
          %s146 = scalar_lea.hbm %s0, %s145
          %s148 = sshll.u32 %s141, 4
          %s149 = int_to_ptr.vmem [resolvable:$true] %s148
          %151 = dma.hbm_to_vmem [thread:$0]  %s146, 128, %s149, %s138
        $region28: #{_layer_norm_impl.1} parent=23 // pred_fallthru
          _
      $region24: #{_layer_norm_impl.1} parent=5 // pred_fallthru
        _
      %p152 = scmp.le.s32.totalorder 1, %s15
      %p153 = scmp.lt.s32.totalorder %s15, 3
      %p154 = pnand %p152, %p153
      %p155 = pneg %p154
      // Predicated region
      $region29: #{_layer_norm_impl.1} parent=5 // pred_check
        _
      $region30: #{_layer_norm_impl.1} parent=5 // pred_check_branch
        %157 = sbr.rel (%p154) target = $region32
      $region31: #{_layer_norm_impl.1} parent=5 // pred_region
        %s158 = ssub.s32 %s15, 1
        %s159 = sand.u32 %s28, 1
        %s160 = scalar_lea.sflag [#allocation3], %s159
        %s161 = sand.u32 %s28, 1
        %s162 = smul.addr %s161, 8
        %s163 = scalar_lea.vmem [#allocation2], %s162
        // Predicated region
        $region33: #{_layer_norm_impl.1} parent=31 // pred_check
          %p164 = pneg %p41
        $region34: #{_layer_norm_impl.1} parent=31 // pred_check_branch
          %166 = sbr.rel (%p164) target = $region36
        $region35: #{_layer_norm_impl.1} parent=31 // pred_region
          %167 = dma.done %s160, 128
        $region36: #{_layer_norm_impl.1} parent=31 // pred_fallthru
          _
        %s168 = sand.u32 %s28, 1
        %s169 = scalar_lea.sflag [#allocation3], %s168
        %s170 = sand.u32 %s28, 1
        %s171 = smul.addr %s170, 8
        %s172 = scalar_lea.vmem [#allocation2], %s171
        %p173 = pneg %p41
        %p174 = pneg %p38
        %p175 = pneg %p62
        %p176 = pneg %p59
        %p177 = pneg %p83
        %p178 = pneg %p80
        %p179 = pneg %p109
        %p180 = pneg %p106
        %s181 = sand.u32 %s96, 1
        %s182 = scalar_lea.sflag [#allocation4], %s181
        %s183 = sand.u32 %s96, 1
        %s184 = smul.addr %s183, 8
        %s185 = scalar_lea.vmem [#allocation5], %s184
        %v186 = vld [vmem:[%s163] sm:$0xff]
        %187 = vadd.xlane.f32.xlu0 %v186
        %v188 = vpop.xlane.xlu0 %187
        %v189 = vrcp.pop 128.0
        %v190 = vmul.f32 %v188, %v189
        %v191 = vsub.f32 %v186, %v190
        %v192 = vmul.f32 %v191, %v191
        %193 = vadd.xlane.f32.xlu0 %v192
        %v194 = vpop.xlane.xlu0 %193
        %v195 = vmul.f32 %v194, %v189
        %v196 = vadd.f32 %v195, 1e-05
        %v197 = vrsqrt.pop %v196
        %v198 = vmul.f32 %v191, %v197
        %v199 = vld [vmem:[%s1] sm:$0x1]
        %v201 = vlaneseq
        %v202 = vshrl.u32 %v201, 7
        %v203 = vsub.s32 0, %v202
        %v204 = vrot.slane %v199, %v203
        %v206 = vmul.f32 %v198, %v204
        %v207 = vld [vmem:[%s2] sm:$0x1]
        %v209 = vlaneseq
        %v210 = vshrl.u32 %v209, 7
        %v211 = vsub.s32 0, %v210
        %v212 = vrot.slane %v207, %v211
        %v214 = vadd.f32 %v206, %v212
        %215 = vst [vmem:[%s185] sm:$0xff] %v214
        %s216 = sand.u32 %s96, 1
        %s217 = scalar_lea.sflag [#allocation4], %s216
        %s218 = sand.u32 %s96, 1
        %s219 = smul.addr %s218, 8
        %s220 = scalar_lea.vmem [#allocation5], %s219
        // Predicated region
        $region37: #{_layer_norm_impl.1} parent=31 // pred_check
          %p221 = pneg %p106
        $region38: #{_layer_norm_impl.1} parent=31 // pred_check_branch
          %223 = sbr.rel (%p221) target = $region40
        $region39: #{_layer_norm_impl.1} parent=31 // pred_region
          %s225 = ssub.s32 128, 128
          %226 = vsyncadd %s217, %s225
          %s227 = smul.addr %s20, 128
          %s228 = scalar_lea.hbm %s3, %s227
          %s230 = sshll.u32 %s220, 4
          %s231 = int_to_ptr.vmem [resolvable:$true] %s230
          %233 = dma.vmem_to_hbm [thread:$0]  %s231, 128, %s228, %s217
        $region40: #{_layer_norm_impl.1} parent=31 // pred_fallthru
          _
      $region32: #{_layer_norm_impl.1} parent=5 // pred_fallthru
        _
      %p234 = scmp.le.s32.totalorder 2, %s15
      // Predicated region
      $region41: #{_layer_norm_impl.1} parent=5 // pred_check
        %p235 = pneg %p234
      $region42: #{_layer_norm_impl.1} parent=5 // pred_check_branch
        %237 = sbr.rel (%p235) target = $region44
      $region43: #{_layer_norm_impl.1} parent=5 // pred_region
        %s238 = ssub.s32 %s15, 2
        // Predicated region
        $region45: #{_layer_norm_impl.1} parent=43 // pred_check
          %p239 = pneg %p112
        $region46: #{_layer_norm_impl.1} parent=43 // pred_check_branch
          %241 = sbr.rel (%p239) target = $region48
        $region47: #{_layer_norm_impl.1} parent=43 // pred_region
          %s242 = sand.u32 %s97, 1
          %s243 = scalar_lea.sflag [#allocation4], %s242
          %s244 = sand.u32 %s97, 1
          %s245 = smul.addr %s244, 8
          %s246 = scalar_lea.vmem [#allocation5], %s245
          %247 = dma.done %s243, 128
        $region48: #{_layer_norm_impl.1} parent=43 // pred_fallthru
          _
      $region44: #{_layer_norm_impl.1} parent=5 // pred_fallthru
        _
    $region6: #{_layer_norm_impl.1} parent=1 // loop_footer
      %s19 = sadd.s32 1, %s15
    $region7: #{_layer_norm_impl.1} parent=1 // loop_footer_branch
      %14 = sbr.rel target = $region3
    $region8: #{_layer_norm_impl.1} parent=1 // loop_exit
      _
    %248 = vsyncpa [#allocation3], 1
    %s249 = scalar_lea.sflag [#allocation3], 1
    %250 = vsyncpa %s249, 1
    %251 = vsyncpa [#allocation4], 1
    %s252 = scalar_lea.sflag [#allocation4], 1
    %253 = vsyncpa %s252, 1

</llo_original>
